<compile_context>
chip_gen: v7x
topology: tpu7x:2x2x1
jax: 0.10.0
libtpu: 0.0.40
codegen_flags: <defaults>
</compile_context>

<pallas_src>
from functools import partial

import numpy as np
import jax
import jax.numpy as jnp
from jax.experimental import pallas as pl
from jax.experimental.pallas import tpu as pltpu

UNDIST_ITERS = 5          # cv2.undistortPoints default iteration count
_MAX_BLOCK_LANES = 32768  # per-block lane cap (keeps footprint << scoped VMEM)

# packed output rows (feature-major; detections along lanes)
ROW_FUX, ROW_HUX, ROW_FUY, ROW_HUY = 0, 1, 2, 3
ROW_SCALE, ROW_WFOOT_Y, ROW_WHEAD_Y, ROW_HEIGHT, ROW_VALID = 4, 5, 6, 7, 8
N_OUT_ROWS = 9


def _round_up(x, m):
    return ((x + m - 1) // m) * m


def _choose_block(n_raw):
    """Pick (block_lanes, padded_lanes): one big block for typical N, >=2
    parallel blocks for large N (v7x megacore), capped for VMEM."""
    n128 = max(128, _round_up(n_raw, 128))
    if n128 <= 1024:
        return n128, n128                       # single block covers everything
    blk = min(_MAX_BLOCK_LANES, _round_up((n128 + 1) // 2, 128))
    n_pad = _round_up(n128, blk)
    return blk, n_pad


def make_henet_kernel(thr_score, target_classes):
    target_classes = tuple(float(c) for c in target_classes)
    thr_score = float(thr_score)

    def kernel(params_ref, det_ref, out_ref):
        # --- scalar parameters (SMEM, scalar unit) -------------------------
        H3, H4, H5 = params_ref[3], params_ref[4], params_ref[5]      # H row 1
        H6, H7, H8 = params_ref[6], params_ref[7], params_ref[8]      # H row 2
        P3, P4, P5 = params_ref[12], params_ref[13], params_ref[14]   # invProj row 1
        a0_y = params_ref[19]                                         # A0[1]
        fx, fy, cx, cy = (params_ref[21], params_ref[22],
                          params_ref[23], params_ref[24])
        k1, k2, p1, p2, k3 = (params_ref[25], params_ref[26], params_ref[27],
                              params_ref[28], params_ref[29])

        # loop-invariant scalar hoists (computed once per block, scalar unit)
        inv_fx = 1.0 / fx
        inv_fy = 1.0 / fy
        two_p1 = 2.0 * p1
        two_p2 = 2.0 * p2

        # --- per-detection features (feature-major, lane-dense) ------------
        det = det_ref[...]                    # (6, B)
        x1 = det[0:1, :]
        y1 = det[1:2, :]
        x2 = det[2:3, :]
        y2 = det[3:4, :]
        score = det[4:5, :]
        cls = det[5:6, :]

        mid_x = (x1 + x2) * 0.5               # shared x of foot & head

        # stack foot (row 0) and head (row 1): one undistort pass for both
        px = jnp.concatenate([mid_x, mid_x], axis=0)   # (2, B)
        py = jnp.concatenate([y2, y1], axis=0)         # (2, B)

        # --- cv2.undistortPoints (plumb bob, P == camera_matrix) -----------
        xn = (px - cx) * inv_fx
        yn = (py - cy) * inv_fy
        x, y = xn, yn
        for _ in range(UNDIST_ITERS):
            r2 = x * x + y * y
            d = 1.0 + ((k3 * r2 + k2) * r2 + k1) * r2
            icdist = pl.reciprocal(d, approx=True)
            icdist = icdist * (2.0 - d * icdist)        # Newton step -> ~f32 acc.
            dx = two_p1 * x * y + p2 * (r2 + 2.0 * x * x)
            dy = p1 * (r2 + 2.0 * y * y) + two_p2 * x * y
            x = (xn - dx) * icdist
            y = (yn - dy) * icdist
        ux = x * fx + cx                      # (2, B): row 0 = foot, row 1 = head
        uy = y * fy + cy

        fux = ux[0:1, :]
        fuy = uy[0:1, :]

        # calc_scale(foot): s = H @ [px, py, 1]; s /= s[2]; scale = s[1] + A0[1]
        h1 = H3 * fux + H4 * fuy + H5
        h2 = H6 * fux + H7 * fuy + H8
        inv_h2 = pl.reciprocal(h2, approx=True)
        inv_h2 = inv_h2 * (2.0 - h2 * inv_h2)           # Newton refinement
        scale = h1 * inv_h2 + a0_y                      # (1, B)

        # cameraToCamera y-row; foot-derived scale reused for the head (torch)
        wy = scale * (P3 * ux + P4 * uy + P5)           # (2, B)
        wfoot_y = wy[0:1, :]
        whead_y = wy[1:2, :]
        height = wfoot_y - whead_y

        # score / class gating (roi lookup is a data-dependent gather in glue)
        cls_ok = jnp.zeros(score.shape, dtype=jnp.bool_)
        for c in target_classes:
            cls_ok = jnp.logical_or(cls_ok, cls == c)
        valid = jnp.logical_and(score > thr_score, cls_ok)

        # --- consolidated stores: one unmasked (8, B) + one (1, B) ----------
        slab8 = jnp.concatenate([ux, uy, scale, wfoot_y, whead_y, height], axis=0)
        out_ref[0:8, :] = slab8
        out_ref[8:9, :] = valid.astype(jnp.float32)

    return kernel


@partial(jax.jit, static_argnames=("thr_score", "target_classes"))
def henet_undist_forward(boxes, scores, class_ids, params, roi, *,
                         thr_score, target_classes):
    """boxes (N,4) f32, scores (N,) f32, class_ids (N,) int, params (30,) f32,
    roi (H,W) int."""
    n_raw = boxes.shape[0]
    blk, n_pad = _choose_block(n_raw)
    num_blocks = n_pad // blk

    # pack into a single feature-major, lane-dense (6, n_pad) f32 slab.
    # Fused transpose + concat (+ benign pad) — no zeros/scatter/transpose chain.
    feat = jnp.concatenate([
        boxes.astype(jnp.float32).T,                        # (4, N)
        scores.astype(jnp.float32)[None, :],                # (1, N)
        class_ids.astype(jnp.float32)[None, :],             # (1, N)
    ], axis=0)                                              # (6, N)
    if n_pad > n_raw:
        cx = params[23]
        cy = params[24]
        pad_col = jnp.stack([cx, cy, cx, cy,
                             jnp.float32(0.0), jnp.float32(-1.0)])
        pad = jnp.broadcast_to(pad_col[:, None], (6, n_pad - n_raw))
        det = jnp.concatenate([feat, pad], axis=1)
    else:
        det = feat

    kernel = make_henet_kernel(thr_score, target_classes)

    cost = pl.CostEstimate(
        flops=170 * n_pad,
        transcendentals=12 * n_pad,
        bytes_accessed=(6 + N_OUT_ROWS) * 4 * n_pad + 30 * 4,
    )

    out = pl.pallas_call(
        kernel,
        out_shape=jax.ShapeDtypeStruct((N_OUT_ROWS, n_pad), jnp.float32),
        grid=(num_blocks,),
        in_specs=[
            pl.BlockSpec(memory_space=pltpu.MemorySpace.SMEM),   # params (untiled)
            pl.BlockSpec((6, blk), lambda i: (0, i)),            # packed detections
        ],
        out_specs=pl.BlockSpec((N_OUT_ROWS, blk), lambda i: (0, i)),
        compiler_params=pltpu.CompilerParams(
            dimension_semantics=("parallel",),
            vmem_limit_bytes=32 * 1024 * 1024,
        ),
        cost_estimate=cost,
    )(params, det)

    # roi[int(p_foot[1]), int(p_foot[0])] == 1 using UNDISTORTED foot, exactly
    # as the PyTorch reference (p_foot is reassigned before the roi check).
    # TODO(synk): in-kernel data-dependent roi gather not expressible cleanly;
    # kept as a fused XLA gather inside this jitted wrapper.
    foot_ux = out[ROW_FUX, :n_raw]
    foot_uy = out[ROW_FUY, :n_raw]
    h_img, w_img = roi.shape
    ix = jnp.clip(foot_ux.astype(jnp.int32), 0, w_img - 1)
    iy = jnp.clip(foot_uy.astype(jnp.int32), 0, h_img - 1)
    roi_ok = roi[iy, ix] == 1

    height = out[ROW_HEIGHT, :n_raw]
    considered = out[ROW_VALID, :n_raw] > 0.5    # score > thr AND class in targets
    in_roi = jnp.logical_and(considered, roi_ok)
    return height, considered, in_roi, out


if __name__ == "__main__":
    key = jax.random.PRNGKey(0)
    k_box, k_wh, k_score, k_cls, k_roi = jax.random.split(key, 5)

    # --- synthetic detections (small shapes; padded to one 128-lane block) --
    n_raw = 8
    img_h, img_w = 64, 64
    xy1 = jax.random.uniform(k_box, (n_raw, 2), minval=4.0, maxval=30.0)
    wh = jax.random.uniform(k_wh, (n_raw, 2), minval=8.0, maxval=24.0)
    boxes = jnp.concatenate([xy1, xy1 + wh], axis=1).astype(jnp.float32)    # (8, 4)
    scores = jax.random.uniform(k_score, (n_raw,)).astype(jnp.float32)      # (8,)
    class_ids = jax.random.randint(k_cls, (n_raw,), 0, 4, dtype=jnp.int32)  # (8,)

    # --- deterministic module "weights" -------------------------------------
    H_mat = np.array([[1.0, 0.01, 0.5],
                      [0.02, 1.0, -0.3],
                      [1e-3, 2e-3, 1.0]], dtype=np.float32)
    invProj = np.array([[0.02, 0.0, -0.6],
                        [0.0, 0.02, -0.6],
                        [0.0, 0.0, 1.0]], dtype=np.float32)
    A0 = np.array([[0.0], [1.5], [0.0]], dtype=np.float32)
    fx, fy, cx, cy = 50.0, 50.0, 32.0, 32.0
    dist = np.array([1e-2, 1e-3, 1e-4, 1e-4, 1e-5], dtype=np.float32)  # k1 k2 p1 p2 k3

    params = jnp.asarray(np.concatenate([
        H_mat.reshape(-1), invProj.reshape(-1), A0.reshape(-1),
        np.array([fx, fy, cx, cy], dtype=np.float32), dist,
    ]).astype(np.float32))                                    # (30,)

    roi = (jax.random.uniform(k_roi, (img_h, img_w)) > 0.2).astype(jnp.int32)

    thr_score = 0.3
    target_classes = (1, 2)

    height, considered, in_roi, raw = jax.block_until_ready(
        henet_undist_forward(boxes, scores, class_ids, params, roi,
                             thr_score=thr_score,
                             target_classes=target_classes))

    # Reconstruct the PyTorch module's dict-valued output (host-side glue).
    Height = {}
    h_np = np.asarray(height)
    c_np = np.asarray(considered)
    r_np = np.asarray(in_roi)
    for i in range(n_raw):
        if c_np[i]:
            Height[i] = round(float(h_np[i]), 2) if r_np[i] else None

    assert np.all(np.isfinite(np.asarray(raw))), "non-finite kernel output"
    # TODO(synk): mask_rcnn branch (skimage canny / find_top_edge) not implemented.
    print("KERNEL_OK")
</pallas_src>

<mosaic_0001>
module attributes {stable_mosaic.version = 11 : i64} {
  func.func @kernel(%arg0: i32, %arg1: memref<30xf32, #tpu.memory_space<smem>>, %arg2: memref<6x128xf32, #tpu.memory_space<vmem>>, %arg3: memref<9x128xf32, #tpu.memory_space<vmem>>) attributes {dimension_semantics = [#tpu.dimension_semantics<parallel>], iteration_bounds = array<i64: 1>, scalar_prefetch = 0 : i64, scratch_operands = 0 : i64, tpu.core_type = #tpu.core_type<tc>, window_params = [{transform_indices = @transform_0, window_bounds = array<i64: 30>}, {transform_indices = @transform_1, window_bounds = array<i64: 6, 128>}, {transform_indices = @transform_2, window_bounds = array<i64: 9, 128>}]} {
    %c3 = arith.constant 3 : index
    %0 = memref.load %arg1[%c3] : memref<30xf32, #tpu.memory_space<smem>>
    %c4 = arith.constant 4 : index
    %1 = memref.load %arg1[%c4] : memref<30xf32, #tpu.memory_space<smem>>
    %c5 = arith.constant 5 : index
    %2 = memref.load %arg1[%c5] : memref<30xf32, #tpu.memory_space<smem>>
    %c6 = arith.constant 6 : index
    %3 = memref.load %arg1[%c6] : memref<30xf32, #tpu.memory_space<smem>>
    %c7 = arith.constant 7 : index
    %4 = memref.load %arg1[%c7] : memref<30xf32, #tpu.memory_space<smem>>
    %c8 = arith.constant 8 : index
    %5 = memref.load %arg1[%c8] : memref<30xf32, #tpu.memory_space<smem>>
    %c12 = arith.constant 12 : index
    %6 = memref.load %arg1[%c12] : memref<30xf32, #tpu.memory_space<smem>>
    %c13 = arith.constant 13 : index
    %7 = memref.load %arg1[%c13] : memref<30xf32, #tpu.memory_space<smem>>
    %c14 = arith.constant 14 : index
    %8 = memref.load %arg1[%c14] : memref<30xf32, #tpu.memory_space<smem>>
    %c19 = arith.constant 19 : index
    %9 = memref.load %arg1[%c19] : memref<30xf32, #tpu.memory_space<smem>>
    %c21 = arith.constant 21 : index
    %10 = memref.load %arg1[%c21] : memref<30xf32, #tpu.memory_space<smem>>
    %c22 = arith.constant 22 : index
    %11 = memref.load %arg1[%c22] : memref<30xf32, #tpu.memory_space<smem>>
    %c23 = arith.constant 23 : index
    %12 = memref.load %arg1[%c23] : memref<30xf32, #tpu.memory_space<smem>>
    %c24 = arith.constant 24 : index
    %13 = memref.load %arg1[%c24] : memref<30xf32, #tpu.memory_space<smem>>
    %c25 = arith.constant 25 : index
    %14 = memref.load %arg1[%c25] : memref<30xf32, #tpu.memory_space<smem>>
    %c26 = arith.constant 26 : index
    %15 = memref.load %arg1[%c26] : memref<30xf32, #tpu.memory_space<smem>>
    %c27 = arith.constant 27 : index
    %16 = memref.load %arg1[%c27] : memref<30xf32, #tpu.memory_space<smem>>
    %c28 = arith.constant 28 : index
    %17 = memref.load %arg1[%c28] : memref<30xf32, #tpu.memory_space<smem>>
    %c29 = arith.constant 29 : index
    %18 = memref.load %arg1[%c29] : memref<30xf32, #tpu.memory_space<smem>>
    %cst = arith.constant 1.000000e+00 : f32
    %19 = arith.divf %cst, %10 : f32
    %cst_0 = arith.constant 1.000000e+00 : f32
    %20 = arith.divf %cst_0, %11 : f32
    %cst_1 = arith.constant 2.000000e+00 : f32
    %21 = arith.mulf %cst_1, %16 : f32
    %cst_2 = arith.constant 2.000000e+00 : f32
    %22 = arith.mulf %cst_2, %17 : f32
    %c0 = arith.constant 0 : index
    %c0_3 = arith.constant 0 : index
    %23 = vector.load %arg2[%c0, %c0_3] : memref<6x128xf32, #tpu.memory_space<vmem>>, vector<6x128xf32>
    %24 = vector.extract_strided_slice %23 {offsets = [0, 0], sizes = [1, 128], strides = [1, 1]} : vector<6x128xf32> to vector<1x128xf32>
    %25 = vector.extract_strided_slice %23 {offsets = [1, 0], sizes = [1, 128], strides = [1, 1]} : vector<6x128xf32> to vector<1x128xf32>
    %26 = vector.extract_strided_slice %23 {offsets = [2, 0], sizes = [1, 128], strides = [1, 1]} : vector<6x128xf32> to vector<1x128xf32>
    %27 = vector.extract_strided_slice %23 {offsets = [3, 0], sizes = [1, 128], strides = [1, 1]} : vector<6x128xf32> to vector<1x128xf32>
    %28 = vector.extract_strided_slice %23 {offsets = [4, 0], sizes = [1, 128], strides = [1, 1]} : vector<6x128xf32> to vector<1x128xf32>
    %29 = vector.extract_strided_slice %23 {offsets = [5, 0], sizes = [1, 128], strides = [1, 1]} : vector<6x128xf32> to vector<1x128xf32>
    %30 = arith.addf %24, %26 : vector<1x128xf32>
    %cst_4 = arith.constant 5.000000e-01 : f32
    %31 = vector.broadcast %cst_4 : f32 to vector<1x128xf32>
    %32 = arith.mulf %30, %31 : vector<1x128xf32>
    %33 = tpu.concatenate %32, %32 in 0 : vector<1x128xf32>, vector<1x128xf32> -> vector<2x128xf32>
    %34 = tpu.concatenate %27, %25 in 0 : vector<1x128xf32>, vector<1x128xf32> -> vector<2x128xf32>
    %35 = vector.broadcast %12 : f32 to vector<2x128xf32>
    %36 = arith.subf %33, %35 : vector<2x128xf32>
    %37 = vector.broadcast %19 : f32 to vector<2x128xf32>
    %38 = arith.mulf %36, %37 : vector<2x128xf32>
    %39 = vector.broadcast %13 : f32 to vector<2x128xf32>
    %40 = arith.subf %34, %39 : vector<2x128xf32>
    %41 = vector.broadcast %20 : f32 to vector<2x128xf32>
    %42 = arith.mulf %40, %41 : vector<2x128xf32>
    %43 = arith.mulf %38, %38 : vector<2x128xf32>
    %44 = arith.mulf %42, %42 : vector<2x128xf32>
    %45 = arith.addf %43, %44 : vector<2x128xf32>
    %46 = vector.broadcast %18 : f32 to vector<2x128xf32>
    %47 = arith.mulf %46, %45 : vector<2x128xf32>
    %48 = vector.broadcast %15 : f32 to vector<2x128xf32>
    %49 = arith.addf %47, %48 : vector<2x128xf32>
    %50 = arith.mulf %49, %45 : vector<2x128xf32>
    %51 = vector.broadcast %14 : f32 to vector<2x128xf32>
    %52 = arith.addf %50, %51 : vector<2x128xf32>
    %53 = arith.mulf %52, %45 : vector<2x128xf32>
    %cst_5 = arith.constant 1.000000e+00 : f32
    %54 = vector.broadcast %cst_5 : f32 to vector<2x128xf32>
    %55 = arith.addf %54, %53 : vector<2x128xf32>
    %56 = tpu.reciprocal %55 {approx = true} : vector<2x128xf32> -> vector<2x128xf32>
    %57 = arith.mulf %55, %56 : vector<2x128xf32>
    %cst_6 = arith.constant 2.000000e+00 : f32
    %58 = vector.broadcast %cst_6 : f32 to vector<2x128xf32>
    %59 = arith.subf %58, %57 : vector<2x128xf32>
    %60 = arith.mulf %56, %59 : vector<2x128xf32>
    %61 = vector.broadcast %21 : f32 to vector<2x128xf32>
    %62 = arith.mulf %61, %38 : vector<2x128xf32>
    %63 = arith.mulf %62, %42 : vector<2x128xf32>
    %cst_7 = arith.constant 2.000000e+00 : f32
    %64 = vector.broadcast %cst_7 : f32 to vector<2x128xf32>
    %65 = arith.mulf %64, %38 : vector<2x128xf32>
    %66 = arith.mulf %65, %38 : vector<2x128xf32>
    %67 = arith.addf %45, %66 : vector<2x128xf32>
    %68 = vector.broadcast %17 : f32 to vector<2x128xf32>
    %69 = arith.mulf %68, %67 : vector<2x128xf32>
    %70 = arith.addf %63, %69 : vector<2x128xf32>
    %cst_8 = arith.constant 2.000000e+00 : f32
    %71 = vector.broadcast %cst_8 : f32 to vector<2x128xf32>
    %72 = arith.mulf %71, %42 : vector<2x128xf32>
    %73 = arith.mulf %72, %42 : vector<2x128xf32>
    %74 = arith.addf %45, %73 : vector<2x128xf32>
    %75 = vector.broadcast %16 : f32 to vector<2x128xf32>
    %76 = arith.mulf %75, %74 : vector<2x128xf32>
    %77 = vector.broadcast %22 : f32 to vector<2x128xf32>
    %78 = arith.mulf %77, %38 : vector<2x128xf32>
    %79 = arith.mulf %78, %42 : vector<2x128xf32>
    %80 = arith.addf %76, %79 : vector<2x128xf32>
    %81 = arith.subf %38, %70 : vector<2x128xf32>
    %82 = arith.mulf %81, %60 : vector<2x128xf32>
    %83 = arith.subf %42, %80 : vector<2x128xf32>
    %84 = arith.mulf %83, %60 : vector<2x128xf32>
    %85 = arith.mulf %82, %82 : vector<2x128xf32>
    %86 = arith.mulf %84, %84 : vector<2x128xf32>
    %87 = arith.addf %85, %86 : vector<2x128xf32>
    %88 = vector.broadcast %18 : f32 to vector<2x128xf32>
    %89 = arith.mulf %88, %87 : vector<2x128xf32>
    %90 = vector.broadcast %15 : f32 to vector<2x128xf32>
    %91 = arith.addf %89, %90 : vector<2x128xf32>
    %92 = arith.mulf %91, %87 : vector<2x128xf32>
    %93 = vector.broadcast %14 : f32 to vector<2x128xf32>
    %94 = arith.addf %92, %93 : vector<2x128xf32>
    %95 = arith.mulf %94, %87 : vector<2x128xf32>
    %cst_9 = arith.constant 1.000000e+00 : f32
    %96 = vector.broadcast %cst_9 : f32 to vector<2x128xf32>
    %97 = arith.addf %96, %95 : vector<2x128xf32>
    %98 = tpu.reciprocal %97 {approx = true} : vector<2x128xf32> -> vector<2x128xf32>
    %99 = arith.mulf %97, %98 : vector<2x128xf32>
    %cst_10 = arith.constant 2.000000e+00 : f32
    %100 = vector.broadcast %cst_10 : f32 to vector<2x128xf32>
    %101 = arith.subf %100, %99 : vector<2x128xf32>
    %102 = arith.mulf %98, %101 : vector<2x128xf32>
    %103 = vector.broadcast %21 : f32 to vector<2x128xf32>
    %104 = arith.mulf %103, %82 : vector<2x128xf32>
    %105 = arith.mulf %104, %84 : vector<2x128xf32>
    %cst_11 = arith.constant 2.000000e+00 : f32
    %106 = vector.broadcast %cst_11 : f32 to vector<2x128xf32>
    %107 = arith.mulf %106, %82 : vector<2x128xf32>
    %108 = arith.mulf %107, %82 : vector<2x128xf32>
    %109 = arith.addf %87, %108 : vector<2x128xf32>
    %110 = vector.broadcast %17 : f32 to vector<2x128xf32>
    %111 = arith.mulf %110, %109 : vector<2x128xf32>
    %112 = arith.addf %105, %111 : vector<2x128xf32>
    %cst_12 = arith.constant 2.000000e+00 : f32
    %113 = vector.broadcast %cst_12 : f32 to vector<2x128xf32>
    %114 = arith.mulf %113, %84 : vector<2x128xf32>
    %115 = arith.mulf %114, %84 : vector<2x128xf32>
    %116 = arith.addf %87, %115 : vector<2x128xf32>
    %117 = vector.broadcast %16 : f32 to vector<2x128xf32>
    %118 = arith.mulf %117, %116 : vector<2x128xf32>
    %119 = vector.broadcast %22 : f32 to vector<2x128xf32>
    %120 = arith.mulf %119, %82 : vector<2x128xf32>
    %121 = arith.mulf %120, %84 : vector<2x128xf32>
    %122 = arith.addf %118, %121 : vector<2x128xf32>
    %123 = arith.subf %38, %112 : vector<2x128xf32>
    %124 = arith.mulf %123, %102 : vector<2x128xf32>
    %125 = arith.subf %42, %122 : vector<2x128xf32>
    %126 = arith.mulf %125, %102 : vector<2x128xf32>
    %127 = arith.mulf %124, %124 : vector<2x128xf32>
    %128 = arith.mulf %126, %126 : vector<2x128xf32>
    %129 = arith.addf %127, %128 : vector<2x128xf32>
    %130 = vector.broadcast %18 : f32 to vector<2x128xf32>
    %131 = arith.mulf %130, %129 : vector<2x128xf32>
    %132 = vector.broadcast %15 : f32 to vector<2x128xf32>
    %133 = arith.addf %131, %132 : vector<2x128xf32>
    %134 = arith.mulf %133, %129 : vector<2x128xf32>
    %135 = vector.broadcast %14 : f32 to vector<2x128xf32>
    %136 = arith.addf %134, %135 : vector<2x128xf32>
    %137 = arith.mulf %136, %129 : vector<2x128xf32>
    %cst_13 = arith.constant 1.000000e+00 : f32
    %138 = vector.broadcast %cst_13 : f32 to vector<2x128xf32>
    %139 = arith.addf %138, %137 : vector<2x128xf32>
    %140 = tpu.reciprocal %139 {approx = true} : vector<2x128xf32> -> vector<2x128xf32>
    %141 = arith.mulf %139, %140 : vector<2x128xf32>
    %cst_14 = arith.constant 2.000000e+00 : f32
    %142 = vector.broadcast %cst_14 : f32 to vector<2x128xf32>
    %143 = arith.subf %142, %141 : vector<2x128xf32>
    %144 = arith.mulf %140, %143 : vector<2x128xf32>
    %145 = vector.broadcast %21 : f32 to vector<2x128xf32>
    %146 = arith.mulf %145, %124 : vector<2x128xf32>
    %147 = arith.mulf %146, %126 : vector<2x128xf32>
    %cst_15 = arith.constant 2.000000e+00 : f32
    %148 = vector.broadcast %cst_15 : f32 to vector<2x128xf32>
    %149 = arith.mulf %148, %124 : vector<2x128xf32>
    %150 = arith.mulf %149, %124 : vector<2x128xf32>
    %151 = arith.addf %129, %150 : vector<2x128xf32>
    %152 = vector.broadcast %17 : f32 to vector<2x128xf32>
    %153 = arith.mulf %152, %151 : vector<2x128xf32>
    %154 = arith.addf %147, %153 : vector<2x128xf32>
    %cst_16 = arith.constant 2.000000e+00 : f32
    %155 = vector.broadcast %cst_16 : f32 to vector<2x128xf32>
    %156 = arith.mulf %155, %126 : vector<2x128xf32>
    %157 = arith.mulf %156, %126 : vector<2x128xf32>
    %158 = arith.addf %129, %157 : vector<2x128xf32>
    %159 = vector.broadcast %16 : f32 to vector<2x128xf32>
    %160 = arith.mulf %159, %158 : vector<2x128xf32>
    %161 = vector.broadcast %22 : f32 to vector<2x128xf32>
    %162 = arith.mulf %161, %124 : vector<2x128xf32>
    %163 = arith.mulf %162, %126 : vector<2x128xf32>
    %164 = arith.addf %160, %163 : vector<2x128xf32>
    %165 = arith.subf %38, %154 : vector<2x128xf32>
    %166 = arith.mulf %165, %144 : vector<2x128xf32>
    %167 = arith.subf %42, %164 : vector<2x128xf32>
    %168 = arith.mulf %167, %144 : vector<2x128xf32>
    %169 = arith.mulf %166, %166 : vector<2x128xf32>
    %170 = arith.mulf %168, %168 : vector<2x128xf32>
    %171 = arith.addf %169, %170 : vector<2x128xf32>
    %172 = vector.broadcast %18 : f32 to vector<2x128xf32>
    %173 = arith.mulf %172, %171 : vector<2x128xf32>
    %174 = vector.broadcast %15 : f32 to vector<2x128xf32>
    %175 = arith.addf %173, %174 : vector<2x128xf32>
    %176 = arith.mulf %175, %171 : vector<2x128xf32>
    %177 = vector.broadcast %14 : f32 to vector<2x128xf32>
    %178 = arith.addf %176, %177 : vector<2x128xf32>
    %179 = arith.mulf %178, %171 : vector<2x128xf32>
    %cst_17 = arith.constant 1.000000e+00 : f32
    %180 = vector.broadcast %cst_17 : f32 to vector<2x128xf32>
    %181 = arith.addf %180, %179 : vector<2x128xf32>
    %182 = tpu.reciprocal %181 {approx = true} : vector<2x128xf32> -> vector<2x128xf32>
    %183 = arith.mulf %181, %182 : vector<2x128xf32>
    %cst_18 = arith.constant 2.000000e+00 : f32
    %184 = vector.broadcast %cst_18 : f32 to vector<2x128xf32>
    %185 = arith.subf %184, %183 : vector<2x128xf32>
    %186 = arith.mulf %182, %185 : vector<2x128xf32>
    %187 = vector.broadcast %21 : f32 to vector<2x128xf32>
    %188 = arith.mulf %187, %166 : vector<2x128xf32>
    %189 = arith.mulf %188, %168 : vector<2x128xf32>
    %cst_19 = arith.constant 2.000000e+00 : f32
    %190 = vector.broadcast %cst_19 : f32 to vector<2x128xf32>
    %191 = arith.mulf %190, %166 : vector<2x128xf32>
    %192 = arith.mulf %191, %166 : vector<2x128xf32>
    %193 = arith.addf %171, %192 : vector<2x128xf32>
    %194 = vector.broadcast %17 : f32 to vector<2x128xf32>
    %195 = arith.mulf %194, %193 : vector<2x128xf32>
    %196 = arith.addf %189, %195 : vector<2x128xf32>
    %cst_20 = arith.constant 2.000000e+00 : f32
    %197 = vector.broadcast %cst_20 : f32 to vector<2x128xf32>
    %198 = arith.mulf %197, %168 : vector<2x128xf32>
    %199 = arith.mulf %198, %168 : vector<2x128xf32>
    %200 = arith.addf %171, %199 : vector<2x128xf32>
    %201 = vector.broadcast %16 : f32 to vector<2x128xf32>
    %202 = arith.mulf %201, %200 : vector<2x128xf32>
    %203 = vector.broadcast %22 : f32 to vector<2x128xf32>
    %204 = arith.mulf %203, %166 : vector<2x128xf32>
    %205 = arith.mulf %204, %168 : vector<2x128xf32>
    %206 = arith.addf %202, %205 : vector<2x128xf32>
    %207 = arith.subf %38, %196 : vector<2x128xf32>
    %208 = arith.mulf %207, %186 : vector<2x128xf32>
    %209 = arith.subf %42, %206 : vector<2x128xf32>
    %210 = arith.mulf %209, %186 : vector<2x128xf32>
    %211 = arith.mulf %208, %208 : vector<2x128xf32>
    %212 = arith.mulf %210, %210 : vector<2x128xf32>
    %213 = arith.addf %211, %212 : vector<2x128xf32>
    %214 = vector.broadcast %18 : f32 to vector<2x128xf32>
    %215 = arith.mulf %214, %213 : vector<2x128xf32>
    %216 = vector.broadcast %15 : f32 to vector<2x128xf32>
    %217 = arith.addf %215, %216 : vector<2x128xf32>
    %218 = arith.mulf %217, %213 : vector<2x128xf32>
    %219 = vector.broadcast %14 : f32 to vector<2x128xf32>
    %220 = arith.addf %218, %219 : vector<2x128xf32>
    %221 = arith.mulf %220, %213 : vector<2x128xf32>
    %cst_21 = arith.constant 1.000000e+00 : f32
    %222 = vector.broadcast %cst_21 : f32 to vector<2x128xf32>
    %223 = arith.addf %222, %221 : vector<2x128xf32>
    %224 = tpu.reciprocal %223 {approx = true} : vector<2x128xf32> -> vector<2x128xf32>
    %225 = arith.mulf %223, %224 : vector<2x128xf32>
    %cst_22 = arith.constant 2.000000e+00 : f32
    %226 = vector.broadcast %cst_22 : f32 to vector<2x128xf32>
    %227 = arith.subf %226, %225 : vector<2x128xf32>
    %228 = arith.mulf %224, %227 : vector<2x128xf32>
    %229 = vector.broadcast %21 : f32 to vector<2x128xf32>
    %230 = arith.mulf %229, %208 : vector<2x128xf32>
    %231 = arith.mulf %230, %210 : vector<2x128xf32>
    %cst_23 = arith.constant 2.000000e+00 : f32
    %232 = vector.broadcast %cst_23 : f32 to vector<2x128xf32>
    %233 = arith.mulf %232, %208 : vector<2x128xf32>
    %234 = arith.mulf %233, %208 : vector<2x128xf32>
    %235 = arith.addf %213, %234 : vector<2x128xf32>
    %236 = vector.broadcast %17 : f32 to vector<2x128xf32>
    %237 = arith.mulf %236, %235 : vector<2x128xf32>
    %238 = arith.addf %231, %237 : vector<2x128xf32>
    %cst_24 = arith.constant 2.000000e+00 : f32
    %239 = vector.broadcast %cst_24 : f32 to vector<2x128xf32>
    %240 = arith.mulf %239, %210 : vector<2x128xf32>
    %241 = arith.mulf %240, %210 : vector<2x128xf32>
    %242 = arith.addf %213, %241 : vector<2x128xf32>
    %243 = vector.broadcast %16 : f32 to vector<2x128xf32>
    %244 = arith.mulf %243, %242 : vector<2x128xf32>
    %245 = vector.broadcast %22 : f32 to vector<2x128xf32>
    %246 = arith.mulf %245, %208 : vector<2x128xf32>
    %247 = arith.mulf %246, %210 : vector<2x128xf32>
    %248 = arith.addf %244, %247 : vector<2x128xf32>
    %249 = arith.subf %38, %238 : vector<2x128xf32>
    %250 = arith.mulf %249, %228 : vector<2x128xf32>
    %251 = arith.subf %42, %248 : vector<2x128xf32>
    %252 = arith.mulf %251, %228 : vector<2x128xf32>
    %253 = vector.broadcast %10 : f32 to vector<2x128xf32>
    %254 = arith.mulf %250, %253 : vector<2x128xf32>
    %255 = vector.broadcast %12 : f32 to vector<2x128xf32>
    %256 = arith.addf %254, %255 : vector<2x128xf32>
    %257 = vector.broadcast %11 : f32 to vector<2x128xf32>
    %258 = arith.mulf %252, %257 : vector<2x128xf32>
    %259 = vector.broadcast %13 : f32 to vector<2x128xf32>
    %260 = arith.addf %258, %259 : vector<2x128xf32>
    %261 = vector.extract_strided_slice %256 {offsets = [0, 0], sizes = [1, 128], strides = [1, 1]} : vector<2x128xf32> to vector<1x128xf32>
    %262 = vector.extract_strided_slice %260 {offsets = [0, 0], sizes = [1, 128], strides = [1, 1]} : vector<2x128xf32> to vector<1x128xf32>
    %263 = vector.broadcast %0 : f32 to vector<1x128xf32>
    %264 = arith.mulf %263, %261 : vector<1x128xf32>
    %265 = vector.broadcast %1 : f32 to vector<1x128xf32>
    %266 = arith.mulf %265, %262 : vector<1x128xf32>
    %267 = arith.addf %264, %266 : vector<1x128xf32>
    %268 = vector.broadcast %2 : f32 to vector<1x128xf32>
    %269 = arith.addf %267, %268 : vector<1x128xf32>
    %270 = vector.broadcast %3 : f32 to vector<1x128xf32>
    %271 = arith.mulf %270, %261 : vector<1x128xf32>
    %272 = vector.broadcast %4 : f32 to vector<1x128xf32>
    %273 = arith.mulf %272, %262 : vector<1x128xf32>
    %274 = arith.addf %271, %273 : vector<1x128xf32>
    %275 = vector.broadcast %5 : f32 to vector<1x128xf32>
    %276 = arith.addf %274, %275 : vector<1x128xf32>
    %277 = tpu.reciprocal %276 {approx = true} : vector<1x128xf32> -> vector<1x128xf32>
    %278 = arith.mulf %276, %277 : vector<1x128xf32>
    %cst_25 = arith.constant 2.000000e+00 : f32
    %279 = vector.broadcast %cst_25 : f32 to vector<1x128xf32>
    %280 = arith.subf %279, %278 : vector<1x128xf32>
    %281 = arith.mulf %277, %280 : vector<1x128xf32>
    %282 = arith.mulf %269, %281 : vector<1x128xf32>
    %283 = vector.broadcast %9 : f32 to vector<1x128xf32>
    %284 = arith.addf %282, %283 : vector<1x128xf32>
    %285 = vector.broadcast %6 : f32 to vector<2x128xf32>
    %286 = arith.mulf %285, %256 : vector<2x128xf32>
    %287 = vector.broadcast %7 : f32 to vector<2x128xf32>
    %288 = arith.mulf %287, %260 : vector<2x128xf32>
    %289 = arith.addf %286, %288 : vector<2x128xf32>
    %290 = vector.broadcast %8 : f32 to vector<2x128xf32>
    %291 = arith.addf %289, %290 : vector<2x128xf32>
    %292 = vector.broadcast %284 : vector<1x128xf32> to vector<2x128xf32>
    %293 = arith.mulf %292, %291 : vector<2x128xf32>
    %294 = vector.extract_strided_slice %293 {offsets = [0, 0], sizes = [1, 128], strides = [1, 1]} : vector<2x128xf32> to vector<1x128xf32>
    %295 = vector.extract_strided_slice %293 {offsets = [1, 0], sizes = [1, 128], strides = [1, 1]} : vector<2x128xf32> to vector<1x128xf32>
    %296 = arith.subf %294, %295 : vector<1x128xf32>
    %false = arith.constant false
    %297 = vector.broadcast %false : i1 to vector<1x128xi1>
    %cst_26 = arith.constant 1.000000e+00 : f32
    %298 = vector.broadcast %cst_26 : f32 to vector<1x128xf32>
    %299 = arith.cmpf oeq, %29, %298 : vector<1x128xf32>
    %300 = arith.ori %297, %299 : vector<1x128xi1>
    %cst_27 = arith.constant 2.000000e+00 : f32
    %301 = vector.broadcast %cst_27 : f32 to vector<1x128xf32>
    %302 = arith.cmpf oeq, %29, %301 : vector<1x128xf32>
    %303 = arith.ori %300, %302 : vector<1x128xi1>
    %cst_28 = arith.constant 3.000000e-01 : f32
    %304 = vector.broadcast %cst_28 : f32 to vector<1x128xf32>
    %305 = arith.cmpf ogt, %28, %304 : vector<1x128xf32>
    %306 = arith.andi %305, %303 : vector<1x128xi1>
    %307 = tpu.concatenate %256, %260, %284, %294, %295, %296 in 0 : vector<2x128xf32>, vector<2x128xf32>, vector<1x128xf32>, vector<1x128xf32>, vector<1x128xf32>, vector<1x128xf32> -> vector<8x128xf32>
    %c0_29 = arith.constant 0 : index
    %c0_30 = arith.constant 0 : index
    %308 = vector.load %arg3[%c0_29, %c0_30] : memref<9x128xf32, #tpu.memory_space<vmem>>, vector<8x128xf32>
    tpu.vector_store %arg3[%c0_29, %c0_30], %307 {strides = array<i32>} : memref<9x128xf32, #tpu.memory_space<vmem>>, vector<8x128xf32>,
    %309 = arith.extui %306 : vector<1x128xi1> to vector<1x128xi32>
    %310 = arith.sitofp %309 : vector<1x128xi32> to vector<1x128xf32>
    %c8_31 = arith.constant 8 : index
    %c0_32 = arith.constant 0 : index
    %311 = vector.load %arg3[%c8_31, %c0_32] : memref<9x128xf32, #tpu.memory_space<vmem>>, vector<1x128xf32>
    tpu.vector_store %arg3[%c8_31, %c0_32], %310 {strides = array<i32>} : memref<9x128xf32, #tpu.memory_space<vmem>>, vector<1x128xf32>,
    return
  }
  func.func @transform_0(%arg0: i32) -> i32 {
    %c0_i32 = arith.constant 0 : i32
    %c0_i32_0 = arith.constant 0 : i32
    return %c0_i32 : i32
  }
  func.func @transform_1(%arg0: i32) -> (i32, i32) {
    %c0_i32 = arith.constant 0 : i32
    %c0_i32_0 = arith.constant 0 : i32
    return %c0_i32, %arg0 : i32, i32
  }
  func.func @transform_2(%arg0: i32) -> (i32, i32) {
    %c0_i32 = arith.constant 0 : i32
    %c0_i32_0 = arith.constant 0 : i32
    return %c0_i32, %arg0 : i32, i32
  }
}

</mosaic_0001>

<llo_original>
// kernel: henet_undist_forward.1
$region0: #{henet_undist_forward.1}
  #allocation0 [shape = 'u32[]', space=smem, size = 0x4, offset = 0x4, fixed_abs, tag = 'smem constant byte address 0x4 - core index']
  #allocation1 [shape = 'u32[144,128]{1,0:T(1,128)}', space=vmem, size = 0x12000, scoped, tag = 'internal scratch']
  %s0 = inlined_call_operand.vmem [shape: f32[30], index: 0, kind: input, shape index: {}]
  %s1 = inlined_call_operand.vmem [shape: f32[6,128], index: 1, kind: input, shape index: {}]
  %s2 = inlined_call_operand.vmem [shape: f32[9,128], index: 2, kind: output, shape index: {}]
  %s3 = sld [smem:[#allocation0]]
  $region22: #{henet_undist_forward.1} parent=0
    _
  %s5 = ssub.s32 1, %s3
  %s6 = scalar_select 0, %s5, %s3
  $region1: #{henet_undist_forward.1} parent=0
    #allocation2 [shape = 'u8[512]{0}', space=smem, size = 0x200, scoped, tag = 'input window, operand 0, single buffered']
    #allocation3 [shape = 's32[1]{0}', space=sflag, size = 0x4, scoped, tag = 'scoped memory for henet_undist_forward.1']
    %7 = vsyncpa [#allocation3], 0
    // Predicated region
    $region2: #{henet_undist_forward.1} parent=1 // pred_check
      _
    $region3: #{henet_undist_forward.1} parent=1 // pred_check_branch
      %9 = sbr.rel (0) target = $region5
    $region4: #{henet_undist_forward.1} parent=1 // pred_region
      %s11 = ssub.s32 16, 16
      %12 = vsyncadd [#allocation3], %s11
      %s14 = sshll.u32 %s0, 4
      %s15 = int_to_ptr.vmem [resolvable:$true] %s14
      %17 = dma.vmem_to_smem %s15, 16, [#allocation2], [#allocation3]
    $region5: #{henet_undist_forward.1} parent=1 // pred_fallthru
      _
    // Predicated region
    $region6: #{henet_undist_forward.1} parent=1 // pred_check
      _
    $region7: #{henet_undist_forward.1} parent=1 // pred_check_branch
      %19 = sbr.rel (0) target = $region9
    $region8: #{henet_undist_forward.1} parent=1 // pred_region
      _
    $region9: #{henet_undist_forward.1} parent=1 // pred_fallthru
      _
    // Predicated region
    $region10: #{henet_undist_forward.1} parent=1 // pred_check
      _
    $region11: #{henet_undist_forward.1} parent=1 // pred_check_branch
      %21 = sbr.rel (0) target = $region13
    $region12: #{henet_undist_forward.1} parent=1 // pred_region
      %22 = dma.done [#allocation3], 16
    $region13: #{henet_undist_forward.1} parent=1 // pred_fallthru
      _
    %23 = sfence
    %s24 = sld [smem:[#allocation2 + $0x3]]
    %s25 = sld [smem:[#allocation2 + $0x4]]
    %s26 = sld [smem:[#allocation2 + $0x5]]
    %s27 = sld [smem:[#allocation2 + $0x6]]
    %s28 = sld [smem:[#allocation2 + $0x7]]
    %s29 = sld [smem:[#allocation2 + $0x8]]
    %s30 = sld [smem:[#allocation2 + $0xc]]
    %s31 = sld [smem:[#allocation2 + $0xd]]
    %s32 = sld [smem:[#allocation2 + $0xe]]
    %s33 = sld [smem:[#allocation2 + $0x13]]
    %s34 = sld [smem:[#allocation2 + $0x15]]
    %s35 = sld [smem:[#allocation2 + $0x16]]
    %s36 = sld [smem:[#allocation2 + $0x17]]
    %s37 = sld [smem:[#allocation2 + $0x18]]
    %s38 = sld [smem:[#allocation2 + $0x19]]
    %s39 = sld [smem:[#allocation2 + $0x1a]]
    %s40 = sld [smem:[#allocation2 + $0x1b]]
    %s41 = sld [smem:[#allocation2 + $0x1c]]
    %s42 = sld [smem:[#allocation2 + $0x1d]]
    %v43 = vstv %s34
    %v44 = vrcp.pop %v43
    %s45 = vtos %v44
    %v46 = vstv %s35
    %v47 = vrcp.pop %v46
    %s48 = vtos %v47
    %s49 = smul.f32 %s40, 2.0
    %s50 = smul.f32 %s41, 2.0
    %v51 = vld [vmem:[%s1] sm:$0x3f]
    %v53 = vrot.slane %v51, 2
    %v55 = vadd.f32 %v51, %v53
    %v56 = vmul.f32 %v55, 0.5
    %v58 = vrot.slane %v56, 7
    %vm60 = vcmask 1040384
    %v61 = vsel %vm60, %v56, %v58
    %v62 = vrot.slane %v51, 3
    %v64 = vsel %vm60, %v62, %v51
    %v65 = vstv %s36
    %v66 = vsub.f32 %v61, %v65
    %v67 = vstv %s45
    %v68 = vmul.f32 %v66, %v67
    %v69 = vstv %s37
    %v70 = vsub.f32 %v64, %v69
    %v71 = vstv %s48
    %v72 = vmul.f32 %v70, %v71
    %v73 = vmul.f32 %v68, %v68
    %v74 = vmul.f32 %v72, %v72
    %v75 = vadd.f32 %v73, %v74
    %v76 = vstv %s42
    %v77 = vmul.f32 %v76, %v75
    %v78 = vstv %s39
    %v79 = vadd.f32 %v77, %v78
    %v80 = vmul.f32 %v79, %v75
    %v81 = vstv %s38
    %v82 = vadd.f32 %v80, %v81
    %v83 = vmul.f32 %v82, %v75
    %v84 = vadd.f32 %v83, 1.0
    %v85 = vrcp.pop %v84
    %v86 = vmul.f32 %v84, %v85
    %v87 = vsub.f32 2.0, %v86
    %v88 = vmul.f32 %v85, %v87
    %v89 = vstv %s49
    %v90 = vmul.f32 %v89, %v68
    %v91 = vmul.f32 %v90, %v72
    %v92 = vmul.f32 %v68, 2.0
    %v93 = vmul.f32 %v92, %v68
    %v94 = vadd.f32 %v75, %v93
    %v95 = vstv %s41
    %v96 = vmul.f32 %v95, %v94
    %v97 = vadd.f32 %v91, %v96
    %v98 = vmul.f32 %v72, 2.0
    %v99 = vmul.f32 %v98, %v72
    %v100 = vadd.f32 %v75, %v99
    %v101 = vstv %s40
    %v102 = vmul.f32 %v101, %v100
    %v103 = vstv %s50
    %v104 = vmul.f32 %v103, %v68
    %v105 = vmul.f32 %v104, %v72
    %v106 = vadd.f32 %v102, %v105
    %v107 = vsub.f32 %v68, %v97
    %v108 = vmul.f32 %v107, %v88
    %v109 = vsub.f32 %v72, %v106
    %v110 = vmul.f32 %v109, %v88
    %v111 = vmul.f32 %v108, %v108
    %v112 = vmul.f32 %v110, %v110
    %v113 = vadd.f32 %v111, %v112
    %v114 = vmul.f32 %v76, %v113
    %v115 = vadd.f32 %v114, %v78
    %v116 = vmul.f32 %v115, %v113
    %v117 = vadd.f32 %v116, %v81
    %v118 = vmul.f32 %v117, %v113
    %v119 = vadd.f32 %v118, 1.0
    %v120 = vrcp.pop %v119
    %v121 = vmul.f32 %v119, %v120
    %v122 = vsub.f32 2.0, %v121
    %v123 = vmul.f32 %v120, %v122
    %v124 = vmul.f32 %v89, %v108
    %v125 = vmul.f32 %v124, %v110
    %v126 = vmul.f32 %v108, 2.0
    %v127 = vmul.f32 %v126, %v108
    %v128 = vadd.f32 %v113, %v127
    %v129 = vmul.f32 %v95, %v128
    %v130 = vadd.f32 %v125, %v129
    %v131 = vmul.f32 %v110, 2.0
    %v132 = vmul.f32 %v131, %v110
    %v133 = vadd.f32 %v113, %v132
    %v134 = vmul.f32 %v101, %v133
    %v135 = vmul.f32 %v103, %v108
    %v136 = vmul.f32 %v135, %v110
    %v137 = vadd.f32 %v134, %v136
    %v138 = vsub.f32 %v68, %v130
    %v139 = vmul.f32 %v138, %v123
    %v140 = vsub.f32 %v72, %v137
    %v141 = vmul.f32 %v140, %v123
    %v142 = vmul.f32 %v139, %v139
    %v143 = vmul.f32 %v141, %v141
    %v144 = vadd.f32 %v142, %v143
    %v145 = vmul.f32 %v76, %v144
    %v146 = vadd.f32 %v145, %v78
    %v147 = vmul.f32 %v146, %v144
    %v148 = vadd.f32 %v147, %v81
    %v149 = vmul.f32 %v148, %v144
    %v150 = vadd.f32 %v149, 1.0
    %v151 = vrcp.pop %v150
    %v152 = vmul.f32 %v150, %v151
    %v153 = vsub.f32 2.0, %v152
    %v154 = vmul.f32 %v151, %v153
    %v155 = vmul.f32 %v89, %v139
    %v156 = vmul.f32 %v155, %v141
    %v157 = vmul.f32 %v139, 2.0
    %v158 = vmul.f32 %v157, %v139
    %v159 = vadd.f32 %v144, %v158
    %v160 = vmul.f32 %v95, %v159
    %v161 = vadd.f32 %v156, %v160
    %v162 = vmul.f32 %v141, 2.0
    %v163 = vmul.f32 %v162, %v141
    %v164 = vadd.f32 %v144, %v163
    %v165 = vmul.f32 %v101, %v164
    %v166 = vmul.f32 %v103, %v139
    %v167 = vmul.f32 %v166, %v141
    %v168 = vadd.f32 %v165, %v167
    %v169 = vsub.f32 %v68, %v161
    %v170 = vmul.f32 %v169, %v154
    %v171 = vsub.f32 %v72, %v168
    %v172 = vmul.f32 %v171, %v154
    %v173 = vmul.f32 %v170, %v170
    %v174 = vmul.f32 %v172, %v172
    %v175 = vadd.f32 %v173, %v174
    %v176 = vmul.f32 %v76, %v175
    %v177 = vadd.f32 %v176, %v78
    %v178 = vmul.f32 %v177, %v175
    %v179 = vadd.f32 %v178, %v81
    %v180 = vmul.f32 %v179, %v175
    %v181 = vadd.f32 %v180, 1.0
    %v182 = vrcp.pop %v181
    %v183 = vmul.f32 %v181, %v182
    %v184 = vsub.f32 2.0, %v183
    %v185 = vmul.f32 %v182, %v184
    %v186 = vmul.f32 %v89, %v170
    %v187 = vmul.f32 %v186, %v172
    %v188 = vmul.f32 %v170, 2.0
    %v189 = vmul.f32 %v188, %v170
    %v190 = vadd.f32 %v175, %v189
    %v191 = vmul.f32 %v95, %v190
    %v192 = vadd.f32 %v187, %v191
    %v193 = vmul.f32 %v172, 2.0
    %v194 = vmul.f32 %v193, %v172
    %v195 = vadd.f32 %v175, %v194
    %v196 = vmul.f32 %v101, %v195
    %v197 = vmul.f32 %v103, %v170
    %v198 = vmul.f32 %v197, %v172
    %v199 = vadd.f32 %v196, %v198
    %v200 = vsub.f32 %v68, %v192
    %v201 = vmul.f32 %v200, %v185
    %v202 = vsub.f32 %v72, %v199
    %v203 = vmul.f32 %v202, %v185
    %v204 = vmul.f32 %v201, %v201
    %v205 = vmul.f32 %v203, %v203
    %v206 = vadd.f32 %v204, %v205
    %v207 = vmul.f32 %v76, %v206
    %v208 = vadd.f32 %v207, %v78
    %v209 = vmul.f32 %v208, %v206
    %v210 = vadd.f32 %v209, %v81
    %v211 = vmul.f32 %v210, %v206
    %v212 = vadd.f32 %v211, 1.0
    %v213 = vrcp.pop %v212
    %v214 = vmul.f32 %v212, %v213
    %v215 = vsub.f32 2.0, %v214
    %v216 = vmul.f32 %v213, %v215
    %v217 = vmul.f32 %v89, %v201
    %v218 = vmul.f32 %v217, %v203
    %v219 = vmul.f32 %v201, 2.0
    %v220 = vmul.f32 %v219, %v201
    %v221 = vadd.f32 %v206, %v220
    %v222 = vmul.f32 %v95, %v221
    %v223 = vadd.f32 %v218, %v222
    %v224 = vmul.f32 %v203, 2.0
    %v225 = vmul.f32 %v224, %v203
    %v226 = vadd.f32 %v206, %v225
    %v227 = vmul.f32 %v101, %v226
    %v228 = vmul.f32 %v103, %v201
    %v229 = vmul.f32 %v228, %v203
    %v230 = vadd.f32 %v227, %v229
    %v231 = vsub.f32 %v68, %v223
    %v232 = vmul.f32 %v231, %v216
    %v233 = vsub.f32 %v72, %v230
    %v234 = vmul.f32 %v233, %v216
    %v235 = vstv %s34
    %v236 = vmul.f32 %v232, %v235
    %v237 = vadd.f32 %v236, %v65
    %v238 = vstv %s35
    %v239 = vmul.f32 %v234, %v238
    %v240 = vadd.f32 %v239, %v69
    %v241 = vstv %s24
    %v242 = vmul.f32 %v241, %v237
    %v243 = vstv %s25
    %v244 = vmul.f32 %v243, %v240
    %v245 = vadd.f32 %v242, %v244
    %v246 = vstv %s26
    %v247 = vadd.f32 %v245, %v246
    %v248 = vstv %s27
    %v249 = vmul.f32 %v248, %v237
    %v250 = vstv %s28
    %v251 = vmul.f32 %v250, %v240
    %v252 = vadd.f32 %v249, %v251
    %v253 = vstv %s29
    %v254 = vadd.f32 %v252, %v253
    %v255 = vrcp.pop %v254
    %v256 = vmul.f32 %v254, %v255
    %v257 = vsub.f32 2.0, %v256
    %v258 = vmul.f32 %v255, %v257
    %v259 = vmul.f32 %v247, %v258
    %v260 = vstv %s33
    %v261 = vadd.f32 %v259, %v260
    %v262 = vstv %s30
    %v263 = vmul.f32 %v262, %v237
    %v264 = vstv %s31
    %v265 = vmul.f32 %v264, %v240
    %v266 = vadd.f32 %v263, %v265
    %v267 = vstv %s32
    %v268 = vadd.f32 %v266, %v267
    %v269 = vlaneseq
    %v270 = vshrl.u32 %v269, 7
    %v271 = vsub.s32 0, %v270
    %v272 = vrot.slane %v261, %v271
    %v273 = vmul.f32 %v272, %v268
    %v275 = vrot.slane %v273, 1
    %v277 = vsub.f32 %v273, %v275
    %vm278 = vcmp.eq.f32.partialorder %v51, 1.0
    %vm279 = vcmp.eq.f32.partialorder %v51, 2.0
    %vm280 = vmor %vm278, %vm279
    %vm281 = vcmp.gt.f32.partialorder %v51, 0.3
    %v282 = vsel %vm280, 1, 0
    %v283 = vrot.slane %v282, 1
    %vm284 = vcmp.ne.s32.totalorder %v283, 0
    %vm285 = vmand %vm281, %vm284
    %v287 = vrot.slane %v240, 6
    %v290 = vrot.slane %v261, 4
    %v292 = vrot.slane %v273, 3
    %v295 = vrot.slane %v277, 1
    %vm297 = vcmask 1041408
    %v298 = vsel %vm297, %v237, %v287
    %vm299 = vcmask 1043456
    %v300 = vsel %vm299, %v298, %v290
    %vm301 = vcmask 1044480
    %v302 = vsel %vm301, %v300, %v292
    %vm303 = vcmask 1045504
    %v304 = vsel %vm303, %v302, %v292
    %vm305 = vcmask 1046528
    %v306 = vsel %vm305, %v304, %v295
    %307 = vst [vmem:[%s2] sm:$0xff] %v306
    %v308 = vsel %vm285, 1, 0
    %v309 = vcvt.s32.f32 %v308
    %310 = vst [vmem:[%s2 + $0x4] sm:$0x10] %v309
    // Predicated region
    $region14: #{henet_undist_forward.1} parent=1 // pred_check
      _
    $region15: #{henet_undist_forward.1} parent=1 // pred_check_branch
      %312 = sbr.rel (0) target = $region17
    $region16: #{henet_undist_forward.1} parent=1 // pred_region
      _
    $region17: #{henet_undist_forward.1} parent=1 // pred_fallthru
      _
    // Predicated region
    $region18: #{henet_undist_forward.1} parent=1 // pred_check
      _
    $region19: #{henet_undist_forward.1} parent=1 // pred_check_branch
      %314 = sbr.rel (0) target = $region21
    $region20: #{henet_undist_forward.1} parent=1 // pred_region
      _
    $region21: #{henet_undist_forward.1} parent=1 // pred_fallthru
      _
    %315 = vsyncpa [#allocation3], 1

</llo_original>
